<compile_context>
chip_gen: v5e
topology: v5e:2x2
jax: 0.10.0
libtpu: 0.0.40
codegen_flags: <defaults>
</compile_context>

<pallas_src>
import functools
import math

import jax
import jax.numpy as jnp
from jax.experimental import pallas as pl
from jax.experimental.pallas import tpu as pltpu


def _mha_kernel(qkv_ref, wqkv_ref, bqkv_ref, wo_ref, bo_ref, o_ref, *,
                heads, att_dim, inv_sqrt_att):
    """Fused multi-head attention for a block of `bt` batch elements.

    qkv_ref  : (bt, S, qc+kc+vc)   packed [Q | K | V] along channels (f32)
    wqkv_ref : (qc+kc+vc, 3*heads*att_dim)  block-diagonal fused projection weight (f32)
    bqkv_ref : (1, 3*heads*att_dim)         fused projection bias (f32)
    wo_ref   : (heads*att_dim, heads*att_dim)  output projection, (in, out) layout, bf16
    bo_ref   : (1, heads*att_dim)              output projection bias, f32
    o_ref    : (bt, S, heads*att_dim)
    """
    bt, S, CC = qkv_ref.shape
    HD = heads * att_dim

    # --- all Q/K/V projections, all heads, all bt batch elems: ONE MXU matmul (f32) ---
    qkv2d = qkv_ref[...].reshape(bt * S, CC).astype(jnp.float32)
    proj = jnp.dot(qkv2d, wqkv_ref[...],
                   preferred_element_type=jnp.float32) + bqkv_ref[...]
    proj = proj.reshape(bt, S, 3 * HD)

    # Lane-tile-aligned slices of the fused projection (offsets are multiples of HD=128).
    pq_all = proj[:, :, 0:HD] * inv_sqrt_att        # fold 1/sqrt(att_dim) into pq
    pk_all = proj[:, :, HD:2 * HD]
    pv_all = proj[:, :, 2 * HD:3 * HD]

    # bf16 operands for the big MXU matmuls; softmax math & accumulations stay f32.
    pq_all = pq_all.astype(jnp.bfloat16)
    pk_all = pk_all.astype(jnp.bfloat16)
    pv_all = pv_all.astype(jnp.bfloat16)

    rows = []
    for b in range(bt):                       # bt and heads are small & static -> unrolled
        houts = []
        for h in range(heads):
            lo, hi = h * att_dim, (h + 1) * att_dim
            pq = pq_all[b, :, lo:hi]          # (S, D) bf16
            pk = pk_all[b, :, lo:hi]
            pv = pv_all[b, :, lo:hi]

            # scores[q, k] = <pq[q], pk[k]>   (scale already folded into pq)
            scores = jax.lax.dot_general(
                pq, pk, (((1,), (1,)), ((), ())),
                preferred_element_type=jnp.float32)             # (Sq, Sk) f32

            # PyTorch nn.Softmax(dim=1) on (B, Sq, Sk): normalize over the QUERY axis.
            m = jnp.max(scores, axis=0, keepdims=True)
            e = jnp.exp(scores - m)
            inv = pl.reciprocal(jnp.sum(e, axis=0, keepdims=True), approx=True)
            attn = (e * inv).astype(jnp.bfloat16)

            houts.append(jnp.dot(attn, pv,
                                 preferred_element_type=jnp.float32))   # (Sq, D) f32
        rows.append(jnp.concatenate(houts, axis=-1))            # (Sq, HD) lane placement

    head_cat = jnp.concatenate(rows, axis=0).astype(jnp.bfloat16)       # (bt*Sq, HD)

    # Output projection: one (bt*Sq, HD) @ (HD, HD) MXU matmul, K = 128 (full MXU width).
    out = jnp.dot(head_cat, wo_ref[...],
                  preferred_element_type=jnp.float32) + bo_ref[...]
    o_ref[...] = out.reshape(bt, S, HD).astype(o_ref.dtype)


def _pick_batch_block(B, max_bt=8):
    """Largest divisor of B that is <= max_bt while keeping >= 2 grid steps
    (so both v7x TensorCores stay fed); amortizes per-step overhead on v5e/v6e."""
    best = 1
    for d in range(1, min(max_bt, B) + 1):
        if B % d == 0 and B // d >= 2:
            best = d
    return best


def multi_head_attention(Q, K, V, wq, bq, wk, bk, wv, bv, wo, bo, *,
                         att_dim, batch_block=None):
    """Forward pass of MultiHeadAttention.

    Q/K/V : (B, C, H, W)
    wq/wk/wv : (heads, C, att_dim)   (already (in, out) layout = PyTorch weight.T)
    bq/bk/bv : (heads, 1, att_dim)
    wo : (att_dim*heads, att_dim*heads) (in, out) layout; bo : (1, att_dim*heads)
    returns : (B, H*W, att_dim*heads)
    """
    B, qc, qh, qw = Q.shape
    _, kc, kh, kw = K.shape
    _, vc, vh, vw = V.shape
    Sq, Sk, Sv = qh * qw, kh * kw, vh * vw
    assert Sk == Sv, "key/value spatial sizes must match"
    # TODO(synk): the packed-QKV fast path assumes equal Q/K spatial sizes; a split-input
    # variant would be needed for Sq != Sk.
    assert Sq == Sk, "this kernel packs Q/K/V along channels; Sq must equal Sk"
    heads = wq.shape[0]
    HD = heads * att_dim
    assert wo.shape == (HD, HD)

    S = Sq
    CC = qc + kc + vc
    f32 = jnp.float32

    # PyTorch `.view(-1, H*W, C)` on a contiguous NCHW tensor -> plain row-major reshape.
    q = Q.reshape(B, S, qc)
    k = K.reshape(B, S, kc)
    v = V.reshape(B, S, vc)
    qkv = jnp.concatenate([q, k, v], axis=-1)           # (B, S, CC): one DMA per step

    # Fuse every per-head projection into one block-diagonal weight:
    #   [Q|K|V] @ wqkv -> [pq_all | pk_all | pv_all], each (S, heads*att_dim).
    wq_all = jnp.transpose(wq, (1, 0, 2)).reshape(qc, HD)
    wk_all = jnp.transpose(wk, (1, 0, 2)).reshape(kc, HD)
    wv_all = jnp.transpose(wv, (1, 0, 2)).reshape(vc, HD)
    wqkv = jnp.zeros((CC, 3 * HD), f32)
    wqkv = wqkv.at[:qc, 0:HD].set(wq_all.astype(f32))
    wqkv = wqkv.at[qc:qc + kc, HD:2 * HD].set(wk_all.astype(f32))
    wqkv = wqkv.at[qc + kc:, 2 * HD:3 * HD].set(wv_all.astype(f32))
    bqkv = jnp.concatenate([bq.reshape(1, HD), bk.reshape(1, HD),
                            bv.reshape(1, HD)], axis=-1).astype(f32)

    wo_b16 = wo.astype(jnp.bfloat16)                    # bf16 MXU operand for out-proj
    bo_f32 = bo.reshape(1, HD).astype(f32)

    bt = batch_block if batch_block is not None else _pick_batch_block(B)
    assert B % bt == 0
    grid = (B // bt,)

    kernel = functools.partial(_mha_kernel, heads=heads, att_dim=att_dim,
                               inv_sqrt_att=1.0 / math.sqrt(att_dim))

    flops = 2 * B * (S * CC * 3 * HD                    # fused projections
                     + heads * 2 * S * S * att_dim      # scores + attn @ v
                     + S * HD * HD)                     # output projection
    bytes_accessed = (qkv.size * 4 + wqkv.size * 4 + bqkv.size * 4
                      + wo_b16.size * 2 + bo_f32.size * 4 + B * S * HD * 4)
    cost = pl.CostEstimate(flops=flops,
                           transcendentals=B * heads * S * S,
                           bytes_accessed=bytes_accessed)

    out = pl.pallas_call(
        kernel,
        out_shape=jax.ShapeDtypeStruct((B, S, HD), Q.dtype),
        grid=grid,
        in_specs=[
            pl.BlockSpec((bt, S, CC), lambda i: (i, 0, 0)),
            # Weights/biases: constant index maps -> VMEM-resident across grid steps.
            pl.BlockSpec((CC, 3 * HD), lambda i: (0, 0)),
            pl.BlockSpec((1, 3 * HD), lambda i: (0, 0)),
            pl.BlockSpec((HD, HD), lambda i: (0, 0)),
            pl.BlockSpec((1, HD), lambda i: (0, 0)),
        ],
        out_specs=pl.BlockSpec((bt, S, HD), lambda i: (i, 0, 0)),
        compiler_params=pltpu.CompilerParams(
            dimension_semantics=("parallel",)),
        cost_estimate=cost,
    )(qkv, wqkv, bqkv, wo_b16, bo_f32)
    return out


def _mha_reference(Q, K, V, wq, bq, wk, bk, wv, bv, wo, bo, *, att_dim):
    """Pure-JAX f32 reference mirroring the PyTorch forward literally."""
    B = Q.shape[0]
    q = Q.reshape(B, Q.shape[2] * Q.shape[3], Q.shape[1])
    k = K.reshape(B, K.shape[2] * K.shape[3], K.shape[1])
    v = V.reshape(B, V.shape[2] * V.shape[3], V.shape[1])
    outs = []
    for h in range(wq.shape[0]):
        pq = q @ wq[h] + bq[h]
        pk = k @ wk[h] + bk[h]
        pv = v @ wv[h] + bv[h]
        s = jnp.einsum('bqd,bkd->bqk', pq, pk) / math.sqrt(att_dim)
        a = jax.nn.softmax(s, axis=1)          # dim=1 == query axis, as in the spec
        outs.append(jnp.einsum('bqk,bkd->bqd', a, pv))
    cat = jnp.concatenate(outs, axis=-1)
    return cat @ wo + bo


if __name__ == "__main__":
    # TODO(synk): the PyTorch Attention.forward prints attn_score.size(); that debug
    # side effect (and the unused out_dim / spectral ctor state) is intentionally omitted.
    key = jax.random.PRNGKey(0)
    ks = jax.random.split(key, 11)

    B = 2
    QC = KC = VC = 4                    # channels
    QH = QW = KH = KW = VH = VW = 8     # spatial -> seq len 64
    ATT_DIM = 64
    HEADS = 2
    OD = ATT_DIM * HEADS                # 128 -> lane-dense output

    Q = jax.random.normal(ks[0], (B, QC, QH, QW), jnp.float32)
    K = jax.random.normal(ks[1], (B, KC, KH, KW), jnp.float32)
    V = jax.random.normal(ks[2], (B, VC, VH, VW), jnp.float32)

    def uinit(k, shape, fan_in):
        bnd = 1.0 / math.sqrt(fan_in)
        return jax.random.uniform(k, shape, jnp.float32, -bnd, bnd)

    # Linear weights stored in (in, out) layout (== PyTorch weight.T), PyTorch-style bounds.
    wq = uinit(ks[3], (HEADS, QC, ATT_DIM), QC)
    bq = uinit(ks[4], (HEADS, 1, ATT_DIM), QC)
    wk = uinit(ks[5], (HEADS, KC, ATT_DIM), KC)
    bk = uinit(ks[6], (HEADS, 1, ATT_DIM), KC)
    wv = uinit(ks[7], (HEADS, VC, ATT_DIM), VC)
    bv = uinit(ks[8], (HEADS, 1, ATT_DIM), VC)
    wo = uinit(ks[9], (OD, OD), OD)
    bo = uinit(ks[10], (1, OD), OD)

    out = multi_head_attention(Q, K, V, wq, bq, wk, bk, wv, bv, wo, bo,
                               att_dim=ATT_DIM)
    out = jax.block_until_ready(out)

    ref = _mha_reference(Q, K, V, wq, bq, wk, bk, wv, bv, wo, bo, att_dim=ATT_DIM)

    assert out.shape == (B, QH * QW, OD), (out.shape, (B, QH * QW, OD))
    max_err = float(jnp.max(jnp.abs(out - ref)))
    # bf16 MXU operands in the attention / output-projection matmuls -> 2e-2 tolerance.
    assert jnp.allclose(out, ref, atol=2e-2, rtol=2e-2), max_err

    print("KERNEL_OK")
</pallas_src>

<mosaic_0001>
module attributes {stable_mosaic.version = 11 : i64} {
  func.func @_mha_kernel(%arg0: i32, %arg1: memref<1x64x12xf32, #tpu.memory_space<vmem>>, %arg2: memref<12x384xf32, #tpu.memory_space<vmem>>, %arg3: memref<1x384xf32, #tpu.memory_space<vmem>>, %arg4: memref<128x128xbf16, #tpu.memory_space<vmem>>, %arg5: memref<1x128xf32, #tpu.memory_space<vmem>>, %arg6: memref<1x64x128xf32, #tpu.memory_space<vmem>>) attributes {dimension_semantics = [#tpu.dimension_semantics<parallel>], iteration_bounds = array<i64: 2>, scalar_prefetch = 0 : i64, scratch_operands = 0 : i64, tpu.core_type = #tpu.core_type<tc>, window_params = [{transform_indices = @transform_0, window_bounds = array<i64: 1, 64, 12>}, {pipeline_mode = #tpu.pipeline_mode<synchronous>, transform_indices = @transform_1, window_bounds = array<i64: 12, 384>}, {pipeline_mode = #tpu.pipeline_mode<synchronous>, transform_indices = @transform_2, window_bounds = array<i64: 1, 384>}, {pipeline_mode = #tpu.pipeline_mode<synchronous>, transform_indices = @transform_3, window_bounds = array<i64: 128, 128>}, {pipeline_mode = #tpu.pipeline_mode<synchronous>, transform_indices = @transform_4, window_bounds = array<i64: 1, 128>}, {transform_indices = @transform_5, window_bounds = array<i64: 1, 64, 128>}]} {
    %c0 = arith.constant 0 : index
    %c0_0 = arith.constant 0 : index
    %c0_1 = arith.constant 0 : index
    %0 = vector.load %arg1[%c0, %c0_0, %c0_1] : memref<1x64x12xf32, #tpu.memory_space<vmem>>, vector<1x64x12xf32>
    %1 = vector.shape_cast %0 : vector<1x64x12xf32> to vector<64x12xf32>
    %c0_2 = arith.constant 0 : index
    %c0_3 = arith.constant 0 : index
    %2 = vector.load %arg2[%c0_2, %c0_3] : memref<12x384xf32, #tpu.memory_space<vmem>>, vector<12x384xf32>
    %cst = arith.constant dense<0.000000e+00> : vector<64x384xf32>
    %3 = tpu.matmul %1, %2, %cst {dimension_numbers = #tpu.dot_dimension_numbers<[1], [0], [0], [1], [0, 0, 1, 1], [], []>} : vector<64x12xf32>, vector<12x384xf32>, vector<64x384xf32> -> vector<64x384xf32>
    %c0_4 = arith.constant 0 : index
    %c0_5 = arith.constant 0 : index
    %4 = vector.load %arg3[%c0_4, %c0_5] : memref<1x384xf32, #tpu.memory_space<vmem>>, vector<1x384xf32>
    %5 = vector.broadcast %4 : vector<1x384xf32> to vector<64x384xf32>
    %6 = arith.addf %3, %5 : vector<64x384xf32>
    %7 = vector.shape_cast %6 : vector<64x384xf32> to vector<1x64x384xf32>
    %8 = vector.extract_strided_slice %7 {offsets = [0, 0, 0], sizes = [1, 64, 128], strides = [1, 1, 1]} : vector<1x64x384xf32> to vector<1x64x128xf32>
    %cst_6 = arith.constant 1.250000e-01 : f32
    %9 = vector.broadcast %cst_6 : f32 to vector<1x64x128xf32>
    %10 = arith.mulf %8, %9 : vector<1x64x128xf32>
    %11 = vector.extract_strided_slice %7 {offsets = [0, 0, 128], sizes = [1, 64, 128], strides = [1, 1, 1]} : vector<1x64x384xf32> to vector<1x64x128xf32>
    %12 = vector.extract_strided_slice %7 {offsets = [0, 0, 256], sizes = [1, 64, 128], strides = [1, 1, 1]} : vector<1x64x384xf32> to vector<1x64x128xf32>
    %13 = arith.truncf %10 : vector<1x64x128xf32> to vector<1x64x128xbf16>
    %14 = arith.truncf %11 : vector<1x64x128xf32> to vector<1x64x128xbf16>
    %15 = arith.truncf %12 : vector<1x64x128xf32> to vector<1x64x128xbf16>
    %16 = vector.extract_strided_slice %13 {offsets = [0, 0, 0], sizes = [1, 64, 64], strides = [1, 1, 1]} : vector<1x64x128xbf16> to vector<1x64x64xbf16>
    %17 = vector.shape_cast %16 : vector<1x64x64xbf16> to vector<64x64xbf16>
    %18 = vector.extract_strided_slice %14 {offsets = [0, 0, 0], sizes = [1, 64, 64], strides = [1, 1, 1]} : vector<1x64x128xbf16> to vector<1x64x64xbf16>
    %19 = vector.shape_cast %18 : vector<1x64x64xbf16> to vector<64x64xbf16>
    %20 = vector.extract_strided_slice %15 {offsets = [0, 0, 0], sizes = [1, 64, 64], strides = [1, 1, 1]} : vector<1x64x128xbf16> to vector<1x64x64xbf16>
    %21 = vector.shape_cast %20 : vector<1x64x64xbf16> to vector<64x64xbf16>
    %cst_7 = arith.constant dense<0.000000e+00> : vector<64x64xf32>
    %22 = tpu.matmul %17, %19, %cst_7 {dimension_numbers = #tpu.dot_dimension_numbers<[1], [1], [0], [0], [0, 0, 1, 0], [], []>} : vector<64x64xbf16>, vector<64x64xbf16>, vector<64x64xf32> -> vector<64x64xf32>
    %cst_8 = arith.constant dense<0xFF800000> : vector<64xf32>
    %23 = vector.multi_reduction <maximumf>, %22, %cst_8 [0] : vector<64x64xf32> to vector<64xf32>
    %24 = vector.shape_cast %23 : vector<64xf32> to vector<1x64xf32>
    %25 = vector.broadcast %24 : vector<1x64xf32> to vector<64x64xf32>
    %26 = arith.subf %22, %25 : vector<64x64xf32>
    %27 = math.exp %26 : vector<64x64xf32>
    %cst_9 = arith.constant dense<0.000000e+00> : vector<64xf32>
    %28 = vector.multi_reduction <add>, %27, %cst_9 [0] : vector<64x64xf32> to vector<64xf32>
    %29 = vector.shape_cast %28 : vector<64xf32> to vector<1x64xf32>
    %30 = tpu.reciprocal %29 {approx = true} : vector<1x64xf32> -> vector<1x64xf32>
    %31 = vector.broadcast %30 : vector<1x64xf32> to vector<64x64xf32>
    %32 = arith.mulf %27, %31 : vector<64x64xf32>
    %33 = arith.truncf %32 : vector<64x64xf32> to vector<64x64xbf16>
    %cst_10 = arith.constant dense<0.000000e+00> : vector<64x64xf32>
    %34 = tpu.matmul %33, %21, %cst_10 {dimension_numbers = #tpu.dot_dimension_numbers<[1], [0], [0], [1], [0, 0, 1, 1], [], []>} : vector<64x64xbf16>, vector<64x64xbf16>, vector<64x64xf32> -> vector<64x64xf32>
    %35 = vector.extract_strided_slice %13 {offsets = [0, 0, 64], sizes = [1, 64, 64], strides = [1, 1, 1]} : vector<1x64x128xbf16> to vector<1x64x64xbf16>
    %36 = vector.shape_cast %35 : vector<1x64x64xbf16> to vector<64x64xbf16>
    %37 = vector.extract_strided_slice %14 {offsets = [0, 0, 64], sizes = [1, 64, 64], strides = [1, 1, 1]} : vector<1x64x128xbf16> to vector<1x64x64xbf16>
    %38 = vector.shape_cast %37 : vector<1x64x64xbf16> to vector<64x64xbf16>
    %39 = vector.extract_strided_slice %15 {offsets = [0, 0, 64], sizes = [1, 64, 64], strides = [1, 1, 1]} : vector<1x64x128xbf16> to vector<1x64x64xbf16>
    %40 = vector.shape_cast %39 : vector<1x64x64xbf16> to vector<64x64xbf16>
    %cst_11 = arith.constant dense<0.000000e+00> : vector<64x64xf32>
    %41 = tpu.matmul %36, %38, %cst_11 {dimension_numbers = #tpu.dot_dimension_numbers<[1], [1], [0], [0], [0, 0, 1, 0], [], []>} : vector<64x64xbf16>, vector<64x64xbf16>, vector<64x64xf32> -> vector<64x64xf32>
    %cst_12 = arith.constant dense<0xFF800000> : vector<64xf32>
    %42 = vector.multi_reduction <maximumf>, %41, %cst_12 [0] : vector<64x64xf32> to vector<64xf32>
    %43 = vector.shape_cast %42 : vector<64xf32> to vector<1x64xf32>
    %44 = vector.broadcast %43 : vector<1x64xf32> to vector<64x64xf32>
    %45 = arith.subf %41, %44 : vector<64x64xf32>
    %46 = math.exp %45 : vector<64x64xf32>
    %cst_13 = arith.constant dense<0.000000e+00> : vector<64xf32>
    %47 = vector.multi_reduction <add>, %46, %cst_13 [0] : vector<64x64xf32> to vector<64xf32>
    %48 = vector.shape_cast %47 : vector<64xf32> to vector<1x64xf32>
    %49 = tpu.reciprocal %48 {approx = true} : vector<1x64xf32> -> vector<1x64xf32>
    %50 = vector.broadcast %49 : vector<1x64xf32> to vector<64x64xf32>
    %51 = arith.mulf %46, %50 : vector<64x64xf32>
    %52 = arith.truncf %51 : vector<64x64xf32> to vector<64x64xbf16>
    %cst_14 = arith.constant dense<0.000000e+00> : vector<64x64xf32>
    %53 = tpu.matmul %52, %40, %cst_14 {dimension_numbers = #tpu.dot_dimension_numbers<[1], [0], [0], [1], [0, 0, 1, 1], [], []>} : vector<64x64xbf16>, vector<64x64xbf16>, vector<64x64xf32> -> vector<64x64xf32>
    %54 = tpu.concatenate %34, %53 in 1 : vector<64x64xf32>, vector<64x64xf32> -> vector<64x128xf32>
    %55 = arith.truncf %54 : vector<64x128xf32> to vector<64x128xbf16>
    %c0_15 = arith.constant 0 : index
    %c0_16 = arith.constant 0 : index
    %56 = vector.load %arg4[%c0_15, %c0_16] : memref<128x128xbf16, #tpu.memory_space<vmem>>, vector<128x128xbf16>
    %cst_17 = arith.constant dense<0.000000e+00> : vector<64x128xf32>
    %57 = tpu.matmul %55, %56, %cst_17 {dimension_numbers = #tpu.dot_dimension_numbers<[1], [0], [0], [1], [0, 0, 1, 1], [], []>} : vector<64x128xbf16>, vector<128x128xbf16>, vector<64x128xf32> -> vector<64x128xf32>
    %c0_18 = arith.constant 0 : index
    %c0_19 = arith.constant 0 : index
    %58 = vector.load %arg5[%c0_18, %c0_19] : memref<1x128xf32, #tpu.memory_space<vmem>>, vector<1x128xf32>
    %59 = vector.broadcast %58 : vector<1x128xf32> to vector<64x128xf32>
    %60 = arith.addf %57, %59 : vector<64x128xf32>
    %61 = vector.shape_cast %60 : vector<64x128xf32> to vector<1x64x128xf32>
    %c0_20 = arith.constant 0 : index
    %c0_21 = arith.constant 0 : index
    %c0_22 = arith.constant 0 : index
    %62 = vector.load %arg6[%c0_20, %c0_21, %c0_22] : memref<1x64x128xf32, #tpu.memory_space<vmem>>, vector<1x64x128xf32>
    tpu.vector_store %arg6[%c0_20, %c0_21, %c0_22], %61 {strides = array<i32>} : memref<1x64x128xf32, #tpu.memory_space<vmem>>, vector<1x64x128xf32>,
    return
  }
  func.func @transform_0(%arg0: i32) -> (i32, i32, i32) {
    %c0_i32 = arith.constant 0 : i32
    %c0_i32_0 = arith.constant 0 : i32
    %c0_i32_1 = arith.constant 0 : i32
    return %arg0, %c0_i32, %c0_i32_0 : i32, i32, i32
  }
  func.func @transform_1(%arg0: i32) -> (i32, i32) {
    %c0_i32 = arith.constant 0 : i32
    %c0_i32_0 = arith.constant 0 : i32
    %c0_i32_1 = arith.constant 0 : i32
    return %c0_i32, %c0_i32_0 : i32, i32
  }
  func.func @transform_2(%arg0: i32) -> (i32, i32) {
    %c0_i32 = arith.constant 0 : i32
    %c0_i32_0 = arith.constant 0 : i32
    %c0_i32_1 = arith.constant 0 : i32
    return %c0_i32, %c0_i32_0 : i32, i32
  }
  func.func @transform_3(%arg0: i32) -> (i32, i32) {
    %c0_i32 = arith.constant 0 : i32
    %c0_i32_0 = arith.constant 0 : i32
    %c0_i32_1 = arith.constant 0 : i32
    return %c0_i32, %c0_i32_0 : i32, i32
  }
  func.func @transform_4(%arg0: i32) -> (i32, i32) {
    %c0_i32 = arith.constant 0 : i32
    %c0_i32_0 = arith.constant 0 : i32
    %c0_i32_1 = arith.constant 0 : i32
    return %c0_i32, %c0_i32_0 : i32, i32
  }
  func.func @transform_5(%arg0: i32) -> (i32, i32, i32) {
    %c0_i32 = arith.constant 0 : i32
    %c0_i32_0 = arith.constant 0 : i32
    %c0_i32_1 = arith.constant 0 : i32
    return %arg0, %c0_i32, %c0_i32_0 : i32, i32, i32
  }
}

</mosaic_0001>

<llo_original>
// kernel: tpu_custom_call.1
$region0: #{tpu_custom_call.1}
  #allocation0 [shape = 'u32[]', space=smem, size = 0x4, offset = 0x4, fixed_abs, tag = 'smem constant byte address 0x4 - core index']
  #allocation1 [shape = 'u32[72,128]{1,0:T(1,128)}', space=vmem, size = 0x9000, scoped, tag = 'internal scratch']
  %s0 = inlined_call_operand.vmem [shape: f32[2,64,12], index: 0, kind: input, shape index: {}]
  %s1 = inlined_call_operand.vmem [shape: f32[12,384], index: 1, kind: input, shape index: {}]
  %s2 = inlined_call_operand.vmem [shape: f32[1,384], index: 2, kind: input, shape index: {}]
  %s3 = inlined_call_operand.vmem [shape: bf16[128,128], index: 3, kind: input, shape index: {}]
  %s4 = inlined_call_operand.vmem [shape: f32[1,128], index: 4, kind: input, shape index: {}]
  %s5 = inlined_call_operand.hbm [shape: f32[2,64,128], index: 5, kind: output, shape index: {}]
  %s6 = sld [smem:[#allocation0]]
  $region53: #{tpu_custom_call.1} parent=0
    _
  %s8 = ssub.s32 1, %s6
  %s9 = scalar_select 0, %s8, %s6
  $region1: #{tpu_custom_call.1} parent=0
    #allocation2 [shape = 'u8[65536]{0}', space=vmem, size = 0x10000, scoped, tag = 'output window, operand 0']
    #allocation3 [shape = 's32[2]{0}', space=sflag, size = 0x8, scoped, tag = 'scoped memory for tpu_custom_call.1']
    %10 = vsyncpa [#allocation3], 0
    %s11 = scalar_lea.sflag [#allocation3], 1
    %12 = vsyncpa %s11, 0
    loop: start=0, step=1, limit=4
    $region2: #{tpu_custom_call.1} parent=1 // loop_pre_header
      _
    $region3: #{tpu_custom_call.1} parent=1 // loop_header
      %s14 = sphi 0, %s18
      %p15 = scmp.ge.s32.totalorder %s14, 4
      %s24 = sphi 0, %s26
      %s27 = sphi 0, %s24
      %s28 = sphi 0, %s27
      %s44 = sphi 0, %s28
      %s48 = sphi 0, %s48
      %s50 = sphi 0, %s48
      %s51 = sphi 0, %s50
      %s65 = sphi 0, %s51
      %s69 = sphi 0, %s69
      %s71 = sphi 0, %s69
      %s72 = sphi 0, %s71
      %s86 = sphi 0, %s72
      %s90 = sphi 0, %s90
      %s92 = sphi 0, %s90
      %s93 = sphi 0, %s92
      %s107 = sphi 0, %s93
      %s111 = sphi 0, %s111
      %s113 = sphi 0, %s111
      %s114 = sphi 0, %s113
      %s128 = sphi 0, %s114
      %s134 = sphi 0, %s136
      %s137 = sphi 0, %s134
      %s138 = sphi 0, %s137
      %s154 = sphi 0, %s138
    $region4: #{tpu_custom_call.1} parent=1 // loop_header_branch
      %17 = sbr.rel (%p15) target = $region8
    $region5: #{tpu_custom_call.1} parent=1 // loop_body
      %s19 = ssub.s32 %s14, 1
      %s20 = ssub.s32 %s14, 2
      %s21 = sadd.s32 %s14, 1
      %s22 = ssub.s32 %s14, %s21
      %p23 = scmp.eq.s32.totalorder %s22, 0
      %s25 = sadd.s32 %s24, 1
      %s26 = scalar_select %p23, %s24, %s25
      %p29 = pneg %p23
      %p30 = scmp.eq.s32.totalorder %s14, 1
      %p31 = por %p29, %p30
      %p32 = scmp.ne.s32.totalorder %s24, %s27
      %p33 = scmp.eq.s32.totalorder %s14, 0
      %p34 = por %p32, %p33
      %p35 = scmp.ne.s32.totalorder %s24, %s27
      %p36 = scmp.eq.s32.totalorder %s19, 1
      %p37 = por %p35, %p36
      %p38 = scmp.ne.s32.totalorder %s27, %s28
      %p39 = scmp.eq.s32.totalorder %s19, 0
      %p40 = por %p38, %p39
      %p41 = scmp.ne.s32.totalorder %s27, %s28
      %p42 = scmp.eq.s32.totalorder %s20, 1
      %p43 = por %p41, %p42
      %p45 = scmp.ne.s32.totalorder %s28, %s44
      %p46 = scmp.eq.s32.totalorder %s20, 0
      %p47 = por %p45, %p46
      %s49 = sadd.s32 %s48, 1
      %p52 = scmp.eq.s32.totalorder %s14, 1
      %p53 = scmp.ne.s32.totalorder %s48, %s50
      %p54 = scmp.eq.s32.totalorder %s14, 0
      %p55 = por %p53, %p54
      %p56 = scmp.ne.s32.totalorder %s48, %s50
      %p57 = scmp.eq.s32.totalorder %s19, 1
      %p58 = por %p56, %p57
      %p59 = scmp.ne.s32.totalorder %s50, %s51
      %p60 = scmp.eq.s32.totalorder %s19, 0
      %p61 = por %p59, %p60
      %p62 = scmp.ne.s32.totalorder %s50, %s51
      %p63 = scmp.eq.s32.totalorder %s20, 1
      %p64 = por %p62, %p63
      %p66 = scmp.ne.s32.totalorder %s51, %s65
      %p67 = scmp.eq.s32.totalorder %s20, 0
      %p68 = por %p66, %p67
      %s70 = sadd.s32 %s69, 1
      %p73 = scmp.eq.s32.totalorder %s14, 1
      %p74 = scmp.ne.s32.totalorder %s69, %s71
      %p75 = scmp.eq.s32.totalorder %s14, 0
      %p76 = por %p74, %p75
      %p77 = scmp.ne.s32.totalorder %s69, %s71
      %p78 = scmp.eq.s32.totalorder %s19, 1
      %p79 = por %p77, %p78
      %p80 = scmp.ne.s32.totalorder %s71, %s72
      %p81 = scmp.eq.s32.totalorder %s19, 0
      %p82 = por %p80, %p81
      %p83 = scmp.ne.s32.totalorder %s71, %s72
      %p84 = scmp.eq.s32.totalorder %s20, 1
      %p85 = por %p83, %p84
      %p87 = scmp.ne.s32.totalorder %s72, %s86
      %p88 = scmp.eq.s32.totalorder %s20, 0
      %p89 = por %p87, %p88
      %s91 = sadd.s32 %s90, 1
      %p94 = scmp.eq.s32.totalorder %s14, 1
      %p95 = scmp.ne.s32.totalorder %s90, %s92
      %p96 = scmp.eq.s32.totalorder %s14, 0
      %p97 = por %p95, %p96
      %p98 = scmp.ne.s32.totalorder %s90, %s92
      %p99 = scmp.eq.s32.totalorder %s19, 1
      %p100 = por %p98, %p99
      %p101 = scmp.ne.s32.totalorder %s92, %s93
      %p102 = scmp.eq.s32.totalorder %s19, 0
      %p103 = por %p101, %p102
      %p104 = scmp.ne.s32.totalorder %s92, %s93
      %p105 = scmp.eq.s32.totalorder %s20, 1
      %p106 = por %p104, %p105
      %p108 = scmp.ne.s32.totalorder %s93, %s107
      %p109 = scmp.eq.s32.totalorder %s20, 0
      %p110 = por %p108, %p109
      %s112 = sadd.s32 %s111, 1
      %p115 = scmp.eq.s32.totalorder %s14, 1
      %p116 = scmp.ne.s32.totalorder %s111, %s113
      %p117 = scmp.eq.s32.totalorder %s14, 0
      %p118 = por %p116, %p117
      %p119 = scmp.ne.s32.totalorder %s111, %s113
      %p120 = scmp.eq.s32.totalorder %s19, 1
      %p121 = por %p119, %p120
      %p122 = scmp.ne.s32.totalorder %s113, %s114
      %p123 = scmp.eq.s32.totalorder %s19, 0
      %p124 = por %p122, %p123
      %p125 = scmp.ne.s32.totalorder %s113, %s114
      %p126 = scmp.eq.s32.totalorder %s20, 1
      %p127 = por %p125, %p126
      %p129 = scmp.ne.s32.totalorder %s114, %s128
      %p130 = scmp.eq.s32.totalorder %s20, 0
      %p131 = por %p129, %p130
      %s132 = ssub.s32 %s14, %s21
      %p133 = scmp.eq.s32.totalorder %s132, 0
      %s135 = sadd.s32 %s134, 1
      %s136 = scalar_select %p133, %s134, %s135
      %p139 = pneg %p133
      %p140 = scmp.eq.s32.totalorder %s14, 1
      %p141 = por %p139, %p140
      %p142 = scmp.ne.s32.totalorder %s134, %s137
      %p143 = scmp.eq.s32.totalorder %s14, 0
      %p144 = por %p142, %p143
      %p145 = scmp.ne.s32.totalorder %s134, %s137
      %p146 = scmp.eq.s32.totalorder %s19, 1
      %p147 = por %p145, %p146
      %p148 = scmp.ne.s32.totalorder %s137, %s138
      %p149 = scmp.eq.s32.totalorder %s19, 0
      %p150 = por %p148, %p149
      %p151 = scmp.ne.s32.totalorder %s137, %s138
      %p152 = scmp.eq.s32.totalorder %s20, 1
      %p153 = por %p151, %p152
      %p155 = scmp.ne.s32.totalorder %s138, %s154
      %p156 = scmp.eq.s32.totalorder %s20, 0
      %p157 = por %p155, %p156
      %p158 = scmp.le.s32.totalorder 1, %s14
      %p159 = scmp.lt.s32.totalorder %s14, 3
      %p160 = pnand %p158, %p159
      %p161 = pneg %p160
      // Predicated region
      $region9: #{tpu_custom_call.1} parent=5 // pred_check
        _
      $region10: #{tpu_custom_call.1} parent=5 // pred_check_branch
        %163 = sbr.rel (%p160) target = $region12
      $region11: #{tpu_custom_call.1} parent=5 // pred_region
        %s164 = ssub.s32 %s14, 1
        // Predicated region
        $region13: #{tpu_custom_call.1} parent=11 // pred_check
          %p165 = pneg %p61
        $region14: #{tpu_custom_call.1} parent=11 // pred_check_branch
          %167 = sbr.rel (%p165) target = $region16
        $region15: #{tpu_custom_call.1} parent=11 // pred_region
          _
        $region16: #{tpu_custom_call.1} parent=11 // pred_fallthru
          _
        // Predicated region
        $region17: #{tpu_custom_call.1} parent=11 // pred_check
          %p168 = pneg %p82
        $region18: #{tpu_custom_call.1} parent=11 // pred_check_branch
          %170 = sbr.rel (%p168) target = $region20
        $region19: #{tpu_custom_call.1} parent=11 // pred_region
          _
        $region20: #{tpu_custom_call.1} parent=11 // pred_fallthru
          _
        // Predicated region
        $region21: #{tpu_custom_call.1} parent=11 // pred_check
          %p171 = pneg %p103
        $region22: #{tpu_custom_call.1} parent=11 // pred_check_branch
          %173 = sbr.rel (%p171) target = $region24
        $region23: #{tpu_custom_call.1} parent=11 // pred_region
          _
        $region24: #{tpu_custom_call.1} parent=11 // pred_fallthru
          _
        // Predicated region
        $region25: #{tpu_custom_call.1} parent=11 // pred_check
          %p174 = pneg %p124
        $region26: #{tpu_custom_call.1} parent=11 // pred_check_branch
          %176 = sbr.rel (%p174) target = $region28
        $region27: #{tpu_custom_call.1} parent=11 // pred_region
          _
        $region28: #{tpu_custom_call.1} parent=11 // pred_fallthru
          _
      $region12: #{tpu_custom_call.1} parent=5 // pred_fallthru
        _
      %p177 = scmp.lt.s32.totalorder %s14, 2
      // Predicated region
      $region29: #{tpu_custom_call.1} parent=5 // pred_check
        %p178 = pneg %p177
      $region30: #{tpu_custom_call.1} parent=5 // pred_check_branch
        %180 = sbr.rel (%p178) target = $region32
      $region31: #{tpu_custom_call.1} parent=5 // pred_region
        // Predicated region
        $region33: #{tpu_custom_call.1} parent=31 // pred_check
          %p181 = pneg %p34
        $region34: #{tpu_custom_call.1} parent=31 // pred_check_branch
          %183 = sbr.rel (%p181) target = $region36
        $region35: #{tpu_custom_call.1} parent=31 // pred_region
          %p184 = scmp.lt.s32.totalorder %s14, 1
          %s185 = scalar_select %p184, %s14, 1
          %s186 = smul.addr %s185, 8
          %s187 = smul.addr %s186, 8
          %s188 = scalar_lea.vmem %s0, %s187
        $region36: #{tpu_custom_call.1} parent=31 // pred_fallthru
          _
      $region32: #{tpu_custom_call.1} parent=5 // pred_fallthru
        _
      %p189 = scmp.le.s32.totalorder 1, %s14
      %p190 = scmp.lt.s32.totalorder %s14, 3
      %p191 = pnand %p189, %p190
      %p192 = pneg %p191
      // Predicated region
      $region37: #{tpu_custom_call.1} parent=5 // pred_check
        _
      $region38: #{tpu_custom_call.1} parent=5 // pred_check_branch
        %194 = sbr.rel (%p191) target = $region40
      $region39: #{tpu_custom_call.1} parent=5 // pred_region
        %s195 = ssub.s32 %s14, 1
        %p196 = scmp.lt.s32.totalorder %s19, 1
        %s197 = scalar_select %p196, %s19, 1
        %s198 = smul.addr %s197, 8
        %s199 = smul.addr %s198, 8
        %s200 = scalar_lea.vmem %s0, %s199
        %p201 = pneg %p40
        %p202 = pneg %p37
        %p203 = pneg %p61
        %p204 = pneg %p58
        %p205 = pneg %p82
        %p206 = pneg %p79
        %p207 = pneg %p103
        %p208 = pneg %p100
        %p209 = pneg %p124
        %p210 = pneg %p121
        %p211 = pneg %p150
        %p212 = pneg %p147
        %s213 = sand.u32 %s137, 1
        %s214 = scalar_lea.sflag [#allocation3], %s213
        %s215 = sand.u32 %s137, 1
        %s216 = smul.addr %s215, 64
        %s217 = scalar_lea.vmem [#allocation2], %s216
        %p218 = scmp.lt.s32.totalorder %s19, 1
        %s219 = scalar_select %p218, %s19, 1
        %s220 = smul.addr %s219, 8
        %s221 = smul.addr %s220, 8
        %s222 = scalar_lea.vmem %s0, %s221
        %v224 = vld [vmem:[%s222] sm:$0xff]
        %v225 = vld [vmem:[%s222 + $0x8] sm:$0xff]
        %v226 = vld [vmem:[%s222 + $0x10] sm:$0xff]
        %v227 = vld [vmem:[%s222 + $0x18] sm:$0xff]
        %v228 = vld [vmem:[%s222 + $0x20] sm:$0xff]
        %v229 = vld [vmem:[%s222 + $0x28] sm:$0xff]
        %v230 = vld [vmem:[%s222 + $0x30] sm:$0xff]
        %v231 = vld [vmem:[%s222 + $0x38] sm:$0xff]
        %v232 = vld [vmem:[%s1] sm:$0xff]
        %v233 = vld [vmem:[%s1 + $0x8] sm:$0xff]
        %v234 = vld [vmem:[%s1 + $0x10] sm:$0xff]
        %v235 = vld [vmem:[%s1 + $0x18] sm:$0xf]
        %v236 = vld [vmem:[%s1 + $0x20] sm:$0xf]
        %v237 = vld [vmem:[%s1 + $0x28] sm:$0xf]
        %v238 = vld [vmem:[%s2] sm:$0x7]
        %v240 = vperm.slane %v238, 0
        %v241 = vperm.slane %v238, 1
        %v242 = vperm.slane %v238, 2
        %vm246 = vcmask 97280
        %v248 = vsel %vm246, %v224, 0
        %v251 = vsel %vm246, %v225, 0
        %v254 = vsel %vm246, %v226, 0
        %v257 = vsel %vm246, %v227, 0
        %v260 = vsel %vm246, %v228, 0
        %v263 = vsel %vm246, %v229, 0
        %v266 = vsel %vm246, %v230, 0
        %v269 = vsel %vm246, %v231, 0
        %vm271 = vcmask 1043456
        %v273 = vsel %vm271, %v235, 0
        %v276 = vsel %vm271, %v236, 0
        %v279 = vsel %vm271, %v237, 0
        %281 = vmatpush.msra.mxu0 0.0
        %282 = vmatpush.msra.mxu0 0.0
        %283 = vmatpush.msra.mxu0 0.0
        %284 = vmatpush.msra.mxu0 0.0
        %285 = vmatpush.msra.mxu0 0.0
        %286 = vmatpush.msra.mxu0 0.0
        %287 = vmatpush.msra.mxu0 0.0
        %288 = vmatpush.msra.mxu0 0.0
        %289 = vmatpush.msra.mxu0 0.0
        %290 = vmatpush.msra.mxu0 0.0
        %291 = vmatpush.msra.mxu0 0.0
        %292 = vmatpush.msra.mxu0 0.0
        %293 = vmatpush.msra.mxu0 0.0
        %294 = vmatpush.msra.mxu0 0.0
        %295 = vmatpush.msra.mxu0 %v273
        %296 = vmatpush.msra.mxu0 %v232
        %297 = vmatmul.f32.gmra.mxu0 %v248
        %v298 = vpop.f32.mrf.mxu0
        %v299 = vadd.f32 %v240, %v298
        %300 = vmatmul.f32.gmra.mxu0 %v251
        %v301 = vpop.f32.mrf.mxu0
        %v302 = vadd.f32 %v240, %v301
        %303 = vmatmul.f32.gmra.mxu0 %v254
        %v304 = vpop.f32.mrf.mxu0
        %v305 = vadd.f32 %v240, %v304
        %306 = vmatmul.f32.gmra.mxu0 %v257
        %v307 = vpop.f32.mrf.mxu0
        %v308 = vadd.f32 %v240, %v307
        %309 = vmatmul.f32.gmra.mxu0 %v260
        %v310 = vpop.f32.mrf.mxu0
        %v311 = vadd.f32 %v240, %v310
        %312 = vmatmul.f32.gmra.mxu0 %v263
        %v313 = vpop.f32.mrf.mxu0
        %v314 = vadd.f32 %v240, %v313
        %315 = vmatmul.f32.gmra.mxu0 %v266
        %v316 = vpop.f32.mrf.mxu0
        %v317 = vadd.f32 %v240, %v316
        %318 = vmatmul.f32.gmra.mxu0 %v269
        %v319 = vpop.f32.mrf.mxu0
        %v320 = vadd.f32 %v240, %v319
        %321 = vdwg.mxu0
        %322 = vmatpush.msra.mxu0 0.0
        %323 = vmatpush.msra.mxu0 0.0
        %324 = vmatpush.msra.mxu0 0.0
        %325 = vmatpush.msra.mxu0 0.0
        %326 = vmatpush.msra.mxu0 0.0
        %327 = vmatpush.msra.mxu0 0.0
        %328 = vmatpush.msra.mxu0 0.0
        %329 = vmatpush.msra.mxu0 0.0
        %330 = vmatpush.msra.mxu0 0.0
        %331 = vmatpush.msra.mxu0 0.0
        %332 = vmatpush.msra.mxu0 0.0
        %333 = vmatpush.msra.mxu0 0.0
        %334 = vmatpush.msra.mxu0 0.0
        %335 = vmatpush.msra.mxu0 0.0
        %336 = vmatpush.msra.mxu0 %v276
        %337 = vmatpush.msra.mxu0 %v233
        %338 = vmatmul.f32.gmra.mxu0 %v248
        %v339 = vpop.f32.mrf.mxu0
        %v340 = vadd.f32 %v241, %v339
        %341 = vmatmul.f32.gmra.mxu0 %v251
        %v342 = vpop.f32.mrf.mxu0
        %v343 = vadd.f32 %v241, %v342
        %344 = vmatmul.f32.gmra.mxu0 %v254
        %v345 = vpop.f32.mrf.mxu0
        %v346 = vadd.f32 %v241, %v345
        %347 = vmatmul.f32.gmra.mxu0 %v257
        %v348 = vpop.f32.mrf.mxu0
        %v349 = vadd.f32 %v241, %v348
        %350 = vmatmul.f32.gmra.mxu0 %v260
        %v351 = vpop.f32.mrf.mxu0
        %v352 = vadd.f32 %v241, %v351
        %353 = vmatmul.f32.gmra.mxu0 %v263
        %v354 = vpop.f32.mrf.mxu0
        %v355 = vadd.f32 %v241, %v354
        %356 = vmatmul.f32.gmra.mxu0 %v266
        %v357 = vpop.f32.mrf.mxu0
        %v358 = vadd.f32 %v241, %v357
        %359 = vmatmul.f32.gmra.mxu0 %v269
        %v360 = vpop.f32.mrf.mxu0
        %v361 = vadd.f32 %v241, %v360
        %362 = vdwg.mxu0
        %363 = vmatpush.msra.mxu0 0.0
        %364 = vmatpush.msra.mxu0 0.0
        %365 = vmatpush.msra.mxu0 0.0
        %366 = vmatpush.msra.mxu0 0.0
        %367 = vmatpush.msra.mxu0 0.0
        %368 = vmatpush.msra.mxu0 0.0
        %369 = vmatpush.msra.mxu0 0.0
        %370 = vmatpush.msra.mxu0 0.0
        %371 = vmatpush.msra.mxu0 0.0
        %372 = vmatpush.msra.mxu0 0.0
        %373 = vmatpush.msra.mxu0 0.0
        %374 = vmatpush.msra.mxu0 0.0
        %375 = vmatpush.msra.mxu0 0.0
        %376 = vmatpush.msra.mxu0 0.0
        %377 = vmatpush.msra.mxu0 %v279
        %378 = vmatpush.msra.mxu0 %v234
        %379 = vmatmul.f32.gmra.mxu0 %v248
        %v380 = vpop.f32.mrf.mxu0
        %v381 = vadd.f32 %v242, %v380
        %382 = vmatmul.f32.gmra.mxu0 %v251
        %v383 = vpop.f32.mrf.mxu0
        %v384 = vadd.f32 %v242, %v383
        %385 = vmatmul.f32.gmra.mxu0 %v254
        %v386 = vpop.f32.mrf.mxu0
        %v387 = vadd.f32 %v242, %v386
        %388 = vmatmul.f32.gmra.mxu0 %v257
        %v389 = vpop.f32.mrf.mxu0
        %v390 = vadd.f32 %v242, %v389
        %391 = vmatmul.f32.gmra.mxu0 %v260
        %v392 = vpop.f32.mrf.mxu0
        %v393 = vadd.f32 %v242, %v392
        %394 = vmatmul.f32.gmra.mxu0 %v263
        %v395 = vpop.f32.mrf.mxu0
        %v396 = vadd.f32 %v242, %v395
        %397 = vmatmul.f32.gmra.mxu0 %v266
        %v398 = vpop.f32.mrf.mxu0
        %v399 = vadd.f32 %v242, %v398
        %400 = vmatmul.f32.gmra.mxu0 %v269
        %v401 = vpop.f32.mrf.mxu0
        %v402 = vadd.f32 %v242, %v401
        %403 = vdwg.mxu0
        %v404 = vmul.f32 %v299, 0.125
        %v405 = vmul.f32 %v302, 0.125
        %v406 = vmul.f32 %v305, 0.125
        %v407 = vmul.f32 %v308, 0.125
        %v408 = vmul.f32 %v311, 0.125
        %v409 = vmul.f32 %v314, 0.125
        %v410 = vmul.f32 %v317, 0.125
        %v411 = vmul.f32 %v320, 0.125
        %v412 = vpack.c.bf16 %v404, %v404
        %v413 = vpack.c.bf16 %v405, %v405
        %v414 = vpack.c.bf16 %v406, %v406
        %v415 = vpack.c.bf16 %v407, %v407
        %v416 = vpack.c.bf16 %v408, %v408
        %v417 = vpack.c.bf16 %v409, %v409
        %v418 = vpack.c.bf16 %v410, %v410
        %v419 = vpack.c.bf16 %v411, %v411
        %v420 = vpack.c.bf16 %v340, %v340
        %v421 = vpack.c.bf16 %v343, %v343
        %v422 = vpack.c.bf16 %v346, %v346
        %v423 = vpack.c.bf16 %v349, %v349
        %v424 = vpack.c.bf16 %v352, %v352
        %v425 = vpack.c.bf16 %v355, %v355
        %v426 = vpack.c.bf16 %v358, %v358
        %v427 = vpack.c.bf16 %v361, %v361
        %v428 = vpack.c.bf16 %v381, %v381
        %v429 = vpack.c.bf16 %v384, %v384
        %v430 = vpack.c.bf16 %v387, %v387
        %v431 = vpack.c.bf16 %v390, %v390
        %v432 = vpack.c.bf16 %v393, %v393
        %v433 = vpack.c.bf16 %v396, %v396
        %v434 = vpack.c.bf16 %v399, %v399
        %v435 = vpack.c.bf16 %v402, %v402
        %v444 = vunpack.c.l.b16 %v412
        %v445 = vunpack.c.l.b16 %v413
        %v446 = vunpack.c.l.b16 %v414
        %v447 = vunpack.c.l.b16 %v415
        %v448 = vunpack.c.l.b16 %v416
        %v449 = vunpack.c.l.b16 %v417
        %v450 = vunpack.c.l.b16 %v418
        %v451 = vunpack.c.l.b16 %v419
        %v452 = vpack.c.b16 %v445, %v444
        %v453 = vpack.c.b16 %v447, %v446
        %v454 = vpack.c.b16 %v449, %v448
        %v455 = vpack.c.b16 %v451, %v450
        %v464 = vunpack.c.l.b16 %v420
        %v465 = vunpack.c.l.b16 %v421
        %v466 = vunpack.c.l.b16 %v422
        %v467 = vunpack.c.l.b16 %v423
        %v468 = vunpack.c.l.b16 %v424
        %v469 = vunpack.c.l.b16 %v425
        %v470 = vunpack.c.l.b16 %v426
        %v471 = vunpack.c.l.b16 %v427
        %v472 = vpack.c.b16 %v465, %v464
        %v473 = vpack.c.b16 %v467, %v466
        %v474 = vpack.c.b16 %v469, %v468
        %v475 = vpack.c.b16 %v471, %v470
        %vm476 = vcmask 523264
        %v478 = vsel %vm476, %v452, 0
        %v481 = vsel %vm476, %v453, 0
        %v484 = vsel %vm476, %v454, 0
        %v487 = vsel %vm476, %v455, 0
        %v490 = vsel %vm476, %v472, 0
        %v493 = vsel %vm476, %v473, 0
        %v496 = vsel %vm476, %v474, 0
        %v499 = vsel %vm476, %v475, 0
        %501 = vmatpush.bf16.xpose.msra.mxu0 0
        %502 = vmatpush.bf16.xpose.msra.mxu0 0
        %503 = vmatpush.bf16.xpose.msra.mxu0 0
        %504 = vmatpush.bf16.xpose.msra.mxu0 0
        %505 = vmatpush.bf16.xpose.msra.mxu0 %v499
        %506 = vmatpush.bf16.xpose.msra.mxu0 %v496
        %507 = vmatpush.bf16.xpose.msra.mxu0 %v493
        %508 = vmatpush.bf16.xpose.msra.mxu0 %v490
        %509 = vmatmul.bf16.gmra.mxu0 %v478
        %v510 = vpop.f32.mrf.mxu0
        %v511 = vadd.f32 0.0, %v510
        %v512 = vpop.f32.mrf.mxu0
        %v513 = vadd.f32 0.0, %v512
        %514 = vmatmul.bf16.gmra.mxu0 %v481
        %v515 = vpop.f32.mrf.mxu0
        %v516 = vadd.f32 0.0, %v515
        %v517 = vpop.f32.mrf.mxu0
        %v518 = vadd.f32 0.0, %v517
        %519 = vmatmul.bf16.gmra.mxu0 %v484
        %v520 = vpop.f32.mrf.mxu0
        %v521 = vadd.f32 0.0, %v520
        %v522 = vpop.f32.mrf.mxu0
        %v523 = vadd.f32 0.0, %v522
        %524 = vmatmul.bf16.gmra.mxu0 %v487
        %v525 = vpop.f32.mrf.mxu0
        %v526 = vadd.f32 0.0, %v525
        %v527 = vpop.f32.mrf.mxu0
        %v528 = vadd.f32 0.0, %v527
        %529 = vdwg.mxu0
        %v530 = vsel %vm476, %v511, -inf
        %v531 = vsel %vm476, %v513, -inf
        %v532 = vsel %vm476, %v516, -inf
        %v533 = vsel %vm476, %v518, -inf
        %v534 = vsel %vm476, %v521, -inf
        %v535 = vmax.f32 %v530, %v534
        %v536 = vsel %vm476, %v523, -inf
        %v537 = vmax.f32 %v531, %v536
        %v538 = vsel %vm476, %v526, -inf
        %v539 = vmax.f32 %v532, %v538
        %v540 = vsel %vm476, %v528, -inf
        %v541 = vmax.f32 %v533, %v540
        %v542 = vmax.f32 %v535, %v537
        %v543 = vmax.f32 %v539, %v541
        %v544 = vmax.f32 %v542, %v543
        %v545 = vrot.slane %v544, 4
        %v546 = vmax.f32 %v544, %v545
        %v547 = vrot.slane %v546, 2
        %v548 = vmax.f32 %v546, %v547
        %v549 = vrot.slane %v548, 1
        %v550 = vmax.f32 %v548, %v549
        %v551 = vsub.f32 %v511, %v550
        %v552 = vsub.f32 %v513, %v550
        %v553 = vsub.f32 %v516, %v550
        %v554 = vsub.f32 %v518, %v550
        %v555 = vsub.f32 %v521, %v550
        %v556 = vsub.f32 %v523, %v550
        %v557 = vsub.f32 %v526, %v550
        %v558 = vsub.f32 %v528, %v550
        %v559 = vmul.f32 %v551, 1.442695
        %v560 = vpow.pop %v559
        %v561 = vmul.f32 %v552, 1.442695
        %v562 = vpow.pop %v561
        %v563 = vmul.f32 %v553, 1.442695
        %v564 = vpow.pop %v563
        %v565 = vmul.f32 %v554, 1.442695
        %v566 = vpow.pop %v565
        %v567 = vmul.f32 %v555, 1.442695
        %v568 = vpow.pop %v567
        %v569 = vmul.f32 %v556, 1.442695
        %v570 = vpow.pop %v569
        %v571 = vmul.f32 %v557, 1.442695
        %v572 = vpow.pop %v571
        %v573 = vmul.f32 %v558, 1.442695
        %v574 = vpow.pop %v573
        %v575 = vsel %vm476, %v560, 0.0
        %v576 = vsel %vm476, %v562, 0.0
        %v577 = vadd.f32 %v575, %v576
        %v578 = vsel %vm476, %v564, 0.0
        %v579 = vadd.f32 %v577, %v578
        %v580 = vsel %vm476, %v566, 0.0
        %v581 = vadd.f32 %v579, %v580
        %v582 = vsel %vm476, %v568, 0.0
        %v583 = vadd.f32 %v581, %v582
        %v584 = vsel %vm476, %v570, 0.0
        %v585 = vadd.f32 %v583, %v584
        %v586 = vsel %vm476, %v572, 0.0
        %v587 = vadd.f32 %v585, %v586
        %v588 = vsel %vm476, %v574, 0.0
        %v589 = vadd.f32 %v587, %v588
        %v590 = vrot.slane %v589, 4
        %v591 = vadd.f32 %v589, %v590
        %v592 = vrot.slane %v591, 2
        %v593 = vadd.f32 %v591, %v592
        %v594 = vrot.slane %v593, 1
        %v595 = vadd.f32 %v593, %v594
        %v596 = vrcp.pop %v595
        %v597 = vmul.f32 %v560, %v596
        %v598 = vmul.f32 %v562, %v596
        %v599 = vmul.f32 %v564, %v596
        %v600 = vmul.f32 %v566, %v596
        %v601 = vmul.f32 %v568, %v596
        %v602 = vmul.f32 %v570, %v596
        %v603 = vmul.f32 %v572, %v596
        %v604 = vmul.f32 %v574, %v596
        %v605 = vpack.c.bf16 %v598, %v597
        %v606 = vpack.c.bf16 %v600, %v599
        %v607 = vpack.c.bf16 %v602, %v601
        %v608 = vpack.c.bf16 %v604, %v603
        %v617 = vunpack.c.l.b16 %v428
        %v618 = vunpack.c.l.b16 %v429
        %v619 = vunpack.c.l.b16 %v430
        %v620 = vunpack.c.l.b16 %v431
        %v621 = vunpack.c.l.b16 %v432
        %v622 = vunpack.c.l.b16 %v433
        %v623 = vunpack.c.l.b16 %v434
        %v624 = vunpack.c.l.b16 %v435
        %v625 = vpack.c.b16 %v618, %v617
        %v626 = vpack.c.b16 %v620, %v619
        %v627 = vpack.c.b16 %v622, %v621
        %v628 = vpack.c.b16 %v624, %v623
        %v634 = vsel %vm476, %v605, 0
        %v637 = vsel %vm476, %v606, 0
        %v640 = vsel %vm476, %v607, 0
        %v643 = vsel %vm476, %v608, 0
        %645 = vmatpush.bf16.msra.mxu0 0
        %646 = vmatpush.bf16.msra.mxu0 0
        %647 = vmatpush.bf16.msra.mxu0 0
        %648 = vmatpush.bf16.msra.mxu0 0
        %649 = vmatpush.bf16.msra.mxu0 %v628
        %650 = vmatpush.bf16.msra.mxu0 %v627
        %651 = vmatpush.bf16.msra.mxu0 %v626
        %652 = vmatpush.bf16.msra.mxu0 %v625
        %653 = vmatmul.bf16.gmra.mxu0 %v634
        %v654 = vpop.f32.mrf.mxu0
        %v655 = vadd.f32 0.0, %v654
        %v656 = vpop.f32.mrf.mxu0
        %v657 = vadd.f32 0.0, %v656
        %658 = vmatmul.bf16.gmra.mxu0 %v637
        %v659 = vpop.f32.mrf.mxu0
        %v660 = vadd.f32 0.0, %v659
        %v661 = vpop.f32.mrf.mxu0
        %v662 = vadd.f32 0.0, %v661
        %663 = vmatmul.bf16.gmra.mxu0 %v640
        %v664 = vpop.f32.mrf.mxu0
        %v665 = vadd.f32 0.0, %v664
        %v666 = vpop.f32.mrf.mxu0
        %v667 = vadd.f32 0.0, %v666
        %668 = vmatmul.bf16.gmra.mxu0 %v643
        %v669 = vpop.f32.mrf.mxu0
        %v670 = vadd.f32 0.0, %v669
        %v671 = vpop.f32.mrf.mxu0
        %v672 = vadd.f32 0.0, %v671
        %673 = vdwg.mxu0
        %674 = vrot.lane.b32.xlu0 %v452, 64
        %v675 = vpop.permute.xlu0 %674
        %676 = vrot.lane.b32.xlu0 %v453, 64
        %v677 = vpop.permute.xlu0 %676
        %678 = vrot.lane.b32.xlu0 %v454, 64
        %v679 = vpop.permute.xlu0 %678
        %680 = vrot.lane.b32.xlu0 %v455, 64
        %v681 = vpop.permute.xlu0 %680
        %682 = vrot.lane.b32.xlu0 %v472, 64
        %v683 = vpop.permute.xlu0 %682
        %684 = vrot.lane.b32.xlu0 %v473, 64
        %v685 = vpop.permute.xlu0 %684
        %686 = vrot.lane.b32.xlu0 %v474, 64
        %v687 = vpop.permute.xlu0 %686
        %688 = vrot.lane.b32.xlu0 %v475, 64
        %v689 = vpop.permute.xlu0 %688
        %v691 = vsel %vm476, %v675, 0
        %v694 = vsel %vm476, %v677, 0
        %v697 = vsel %vm476, %v679, 0
        %v700 = vsel %vm476, %v681, 0
        %v703 = vsel %vm476, %v683, 0
        %v706 = vsel %vm476, %v685, 0
        %v709 = vsel %vm476, %v687, 0
        %v712 = vsel %vm476, %v689, 0
        %714 = vmatpush.bf16.xpose.msra.mxu0 0
        %715 = vmatpush.bf16.xpose.msra.mxu0 0
        %716 = vmatpush.bf16.xpose.msra.mxu0 0
        %717 = vmatpush.bf16.xpose.msra.mxu0 0
        %718 = vmatpush.bf16.xpose.msra.mxu0 %v712
        %719 = vmatpush.bf16.xpose.msra.mxu0 %v709
        %720 = vmatpush.bf16.xpose.msra.mxu0 %v706
        %721 = vmatpush.bf16.xpose.msra.mxu0 %v703
        %722 = vmatmul.bf16.gmra.mxu0 %v691
        %v723 = vpop.f32.mrf.mxu0
        %v724 = vadd.f32 0.0, %v723
        %v725 = vpop.f32.mrf.mxu0
        %v726 = vadd.f32 0.0, %v725
        %727 = vmatmul.bf16.gmra.mxu0 %v694
        %v728 = vpop.f32.mrf.mxu0
        %v729 = vadd.f32 0.0, %v728
        %v730 = vpop.f32.mrf.mxu0
        %v731 = vadd.f32 0.0, %v730
        %732 = vmatmul.bf16.gmra.mxu0 %v697
        %v733 = vpop.f32.mrf.mxu0
        %v734 = vadd.f32 0.0, %v733
        %v735 = vpop.f32.mrf.mxu0
        %v736 = vadd.f32 0.0, %v735
        %737 = vmatmul.bf16.gmra.mxu0 %v700
        %v738 = vpop.f32.mrf.mxu0
        %v739 = vadd.f32 0.0, %v738
        %v740 = vpop.f32.mrf.mxu0
        %v741 = vadd.f32 0.0, %v740
        %742 = vdwg.mxu0
        %v743 = vsel %vm476, %v724, -inf
        %v744 = vsel %vm476, %v726, -inf
        %v745 = vsel %vm476, %v729, -inf
        %v746 = vsel %vm476, %v731, -inf
        %v747 = vsel %vm476, %v734, -inf
        %v748 = vmax.f32 %v743, %v747
        %v749 = vsel %vm476, %v736, -inf
        %v750 = vmax.f32 %v744, %v749
        %v751 = vsel %vm476, %v739, -inf
        %v752 = vmax.f32 %v745, %v751
        %v753 = vsel %vm476, %v741, -inf
        %v754 = vmax.f32 %v746, %v753
        %v755 = vmax.f32 %v748, %v750
        %v756 = vmax.f32 %v752, %v754
        %v757 = vmax.f32 %v755, %v756
        %v758 = vrot.slane %v757, 4
        %v759 = vmax.f32 %v757, %v758
        %v760 = vrot.slane %v759, 2
        %v761 = vmax.f32 %v759, %v760
        %v762 = vrot.slane %v761, 1
        %v763 = vmax.f32 %v761, %v762
        %v764 = vsub.f32 %v724, %v763
        %v765 = vsub.f32 %v726, %v763
        %v766 = vsub.f32 %v729, %v763
        %v767 = vsub.f32 %v731, %v763
        %v768 = vsub.f32 %v734, %v763
        %v769 = vsub.f32 %v736, %v763
        %v770 = vsub.f32 %v739, %v763
        %v771 = vsub.f32 %v741, %v763
        %v772 = vmul.f32 %v764, 1.442695
        %v773 = vpow.pop %v772
        %v774 = vmul.f32 %v765, 1.442695
        %v775 = vpow.pop %v774
        %v776 = vmul.f32 %v766, 1.442695
        %v777 = vpow.pop %v776
        %v778 = vmul.f32 %v767, 1.442695
        %v779 = vpow.pop %v778
        %v780 = vmul.f32 %v768, 1.442695
        %v781 = vpow.pop %v780
        %v782 = vmul.f32 %v769, 1.442695
        %v783 = vpow.pop %v782
        %v784 = vmul.f32 %v770, 1.442695
        %v785 = vpow.pop %v784
        %v786 = vmul.f32 %v771, 1.442695
        %v787 = vpow.pop %v786
        %v788 = vsel %vm476, %v773, 0.0
        %v789 = vsel %vm476, %v775, 0.0
        %v790 = vadd.f32 %v788, %v789
        %v791 = vsel %vm476, %v777, 0.0
        %v792 = vadd.f32 %v790, %v791
        %v793 = vsel %vm476, %v779, 0.0
        %v794 = vadd.f32 %v792, %v793
        %v795 = vsel %vm476, %v781, 0.0
        %v796 = vadd.f32 %v794, %v795
        %v797 = vsel %vm476, %v783, 0.0
        %v798 = vadd.f32 %v796, %v797
        %v799 = vsel %vm476, %v785, 0.0
        %v800 = vadd.f32 %v798, %v799
        %v801 = vsel %vm476, %v787, 0.0
        %v802 = vadd.f32 %v800, %v801
        %v803 = vrot.slane %v802, 4
        %v804 = vadd.f32 %v802, %v803
        %v805 = vrot.slane %v804, 2
        %v806 = vadd.f32 %v804, %v805
        %v807 = vrot.slane %v806, 1
        %v808 = vadd.f32 %v806, %v807
        %v809 = vrcp.pop %v808
        %v810 = vmul.f32 %v773, %v809
        %v811 = vmul.f32 %v775, %v809
        %v812 = vmul.f32 %v777, %v809
        %v813 = vmul.f32 %v779, %v809
        %v814 = vmul.f32 %v781, %v809
        %v815 = vmul.f32 %v783, %v809
        %v816 = vmul.f32 %v785, %v809
        %v817 = vmul.f32 %v787, %v809
        %v818 = vpack.c.bf16 %v811, %v810
        %v819 = vpack.c.bf16 %v813, %v812
        %v820 = vpack.c.bf16 %v815, %v814
        %v821 = vpack.c.bf16 %v817, %v816
        %822 = vrot.lane.b32.xlu0 %v625, 64
        %v823 = vpop.permute.xlu0 %822
        %824 = vrot.lane.b32.xlu0 %v626, 64
        %v825 = vpop.permute.xlu0 %824
        %826 = vrot.lane.b32.xlu0 %v627, 64
        %v827 = vpop.permute.xlu0 %826
        %828 = vrot.lane.b32.xlu0 %v628, 64
        %v829 = vpop.permute.xlu0 %828
        %v835 = vsel %vm476, %v818, 0
        %v838 = vsel %vm476, %v819, 0
        %v841 = vsel %vm476, %v820, 0
        %v844 = vsel %vm476, %v821, 0
        %846 = vmatpush.bf16.msra.mxu0 0
        %847 = vmatpush.bf16.msra.mxu0 0
        %848 = vmatpush.bf16.msra.mxu0 0
        %849 = vmatpush.bf16.msra.mxu0 0
        %850 = vmatpush.bf16.msra.mxu0 %v829
        %851 = vmatpush.bf16.msra.mxu0 %v827
        %852 = vmatpush.bf16.msra.mxu0 %v825
        %853 = vmatpush.bf16.msra.mxu0 %v823
        %854 = vmatmul.bf16.gmra.mxu0 %v835
        %v855 = vpop.f32.mrf.mxu0
        %v856 = vadd.f32 0.0, %v855
        %v857 = vpop.f32.mrf.mxu0
        %v858 = vadd.f32 0.0, %v857
        %859 = vmatmul.bf16.gmra.mxu0 %v838
        %v860 = vpop.f32.mrf.mxu0
        %v861 = vadd.f32 0.0, %v860
        %v862 = vpop.f32.mrf.mxu0
        %v863 = vadd.f32 0.0, %v862
        %864 = vmatmul.bf16.gmra.mxu0 %v841
        %v865 = vpop.f32.mrf.mxu0
        %v866 = vadd.f32 0.0, %v865
        %v867 = vpop.f32.mrf.mxu0
        %v868 = vadd.f32 0.0, %v867
        %869 = vmatmul.bf16.gmra.mxu0 %v844
        %v870 = vpop.f32.mrf.mxu0
        %v871 = vadd.f32 0.0, %v870
        %v872 = vpop.f32.mrf.mxu0
        %v873 = vadd.f32 0.0, %v872
        %874 = vdwg.mxu0
        %883 = vrot.lane.b32.xlu0 %v856, 64
        %v884 = vpop.permute.xlu0 %883
        %885 = vrot.lane.b32.xlu0 %v858, 64
        %v886 = vpop.permute.xlu0 %885
        %887 = vrot.lane.b32.xlu0 %v861, 64
        %v888 = vpop.permute.xlu0 %887
        %889 = vrot.lane.b32.xlu0 %v863, 64
        %v890 = vpop.permute.xlu0 %889
        %891 = vrot.lane.b32.xlu0 %v866, 64
        %v892 = vpop.permute.xlu0 %891
        %893 = vrot.lane.b32.xlu0 %v868, 64
        %v894 = vpop.permute.xlu0 %893
        %895 = vrot.lane.b32.xlu0 %v871, 64
        %v896 = vpop.permute.xlu0 %895
        %897 = vrot.lane.b32.xlu0 %v873, 64
        %v898 = vpop.permute.xlu0 %897
        %v907 = vsel %vm476, %v655, %v884
        %v908 = vsel %vm476, %v657, %v886
        %v909 = vsel %vm476, %v660, %v888
        %v910 = vsel %vm476, %v662, %v890
        %v911 = vsel %vm476, %v665, %v892
        %v912 = vsel %vm476, %v667, %v894
        %v913 = vsel %vm476, %v670, %v896
        %v914 = vsel %vm476, %v672, %v898
        %v915 = vpack.c.bf16 %v908, %v907
        %v916 = vpack.c.bf16 %v910, %v909
        %v917 = vpack.c.bf16 %v912, %v911
        %v918 = vpack.c.bf16 %v914, %v913
        %v919 = vld [vmem:[%s3] sm:$0xf]
        %v920 = vld [vmem:[%s3 + $0x4] sm:$0xf]
        %v921 = vld [vmem:[%s3 + $0x8] sm:$0xf]
        %v922 = vld [vmem:[%s3 + $0xc] sm:$0xf]
        %v923 = vld [vmem:[%s3 + $0x10] sm:$0xf]
        %v924 = vld [vmem:[%s3 + $0x14] sm:$0xf]
        %v925 = vld [vmem:[%s3 + $0x18] sm:$0xf]
        %v926 = vld [vmem:[%s3 + $0x1c] sm:$0xf]
        %v927 = vld [vmem:[%s3 + $0x20] sm:$0xf]
        %v928 = vld [vmem:[%s3 + $0x24] sm:$0xf]
        %v929 = vld [vmem:[%s3 + $0x28] sm:$0xf]
        %v930 = vld [vmem:[%s3 + $0x2c] sm:$0xf]
        %v931 = vld [vmem:[%s3 + $0x30] sm:$0xf]
        %v932 = vld [vmem:[%s3 + $0x34] sm:$0xf]
        %v933 = vld [vmem:[%s3 + $0x38] sm:$0xf]
        %v934 = vld [vmem:[%s3 + $0x3c] sm:$0xf]
        %v935 = vld [vmem:[%s4] sm:$0x1]
        %v937 = vperm.slane %v935, 0
        %v955 = vunpack.c.l.b16 %v919
        %v956 = vunpack.c.l.b16 %v920
        %v957 = vunpack.c.l.b16 %v921
        %v958 = vunpack.c.l.b16 %v922
        %v959 = vunpack.c.l.b16 %v923
        %v960 = vunpack.c.l.b16 %v924
        %v961 = vunpack.c.l.b16 %v925
        %v962 = vunpack.c.l.b16 %v926
        %v963 = vunpack.c.l.b16 %v927
        %v964 = vunpack.c.l.b16 %v928
        %v965 = vunpack.c.l.b16 %v929
        %v966 = vunpack.c.l.b16 %v930
        %v967 = vunpack.c.l.b16 %v931
        %v968 = vunpack.c.l.b16 %v932
        %v969 = vunpack.c.l.b16 %v933
        %v970 = vunpack.c.l.b16 %v934
        %v971 = vpack.c.b16 %v956, %v955
        %v972 = vpack.c.b16 %v958, %v957
        %v973 = vpack.c.b16 %v960, %v959
        %v974 = vpack.c.b16 %v962, %v961
        %v975 = vpack.c.b16 %v964, %v963
        %v976 = vpack.c.b16 %v966, %v965
        %v977 = vpack.c.b16 %v968, %v967
        %v978 = vpack.c.b16 %v970, %v969
        %987 = vmatpush.bf16.msra.mxu0 %v978
        %988 = vmatpush.bf16.msra.mxu0 %v977
        %989 = vmatpush.bf16.msra.mxu0 %v976
        %990 = vmatpush.bf16.msra.mxu0 %v975
        %991 = vmatpush.bf16.msra.mxu0 %v974
        %992 = vmatpush.bf16.msra.mxu0 %v973
        %993 = vmatpush.bf16.msra.mxu0 %v972
        %994 = vmatpush.bf16.msra.mxu0 %v971
        %995 = vmatmul.bf16.gmra.mxu0 %v915
        %v996 = vpop.f32.mrf.mxu0
        %v997 = vadd.f32 %v937, %v996
        %v998 = vpop.f32.mrf.mxu0
        %v999 = vadd.f32 %v937, %v998
        %1000 = vmatmul.bf16.gmra.mxu0 %v916
        %v1001 = vpop.f32.mrf.mxu0
        %v1002 = vadd.f32 %v937, %v1001
        %v1003 = vpop.f32.mrf.mxu0
        %v1004 = vadd.f32 %v937, %v1003
        %1005 = vmatmul.bf16.gmra.mxu0 %v917
        %v1006 = vpop.f32.mrf.mxu0
        %v1007 = vadd.f32 %v937, %v1006
        %v1008 = vpop.f32.mrf.mxu0
        %v1009 = vadd.f32 %v937, %v1008
        %1010 = vmatmul.bf16.gmra.mxu0 %v918
        %v1011 = vpop.f32.mrf.mxu0
        %v1012 = vadd.f32 %v937, %v1011
        %v1013 = vpop.f32.mrf.mxu0
        %v1014 = vadd.f32 %v937, %v1013
        %1015 = vdwg.mxu0
        %1016 = vst [vmem:[%s217] sm:$0xff] %v997
        %1017 = vst [vmem:[%s217 + $0x8] sm:$0xff] %v999
        %1018 = vst [vmem:[%s217 + $0x10] sm:$0xff] %v1002
        %1019 = vst [vmem:[%s217 + $0x18] sm:$0xff] %v1004
        %1020 = vst [vmem:[%s217 + $0x20] sm:$0xff] %v1007
        %1021 = vst [vmem:[%s217 + $0x28] sm:$0xff] %v1009
        %1022 = vst [vmem:[%s217 + $0x30] sm:$0xff] %v1012
        %1023 = vst [vmem:[%s217 + $0x38] sm:$0xff] %v1014
        %s1024 = sand.u32 %s137, 1
        %s1025 = scalar_lea.sflag [#allocation3], %s1024
        %s1026 = sand.u32 %s137, 1
        %s1027 = smul.addr %s1026, 64
        %s1028 = scalar_lea.vmem [#allocation2], %s1027
        // Predicated region
        $region41: #{tpu_custom_call.1} parent=39 // pred_check
          %p1029 = pneg %p147
        $region42: #{tpu_custom_call.1} parent=39 // pred_check_branch
          %1031 = sbr.rel (%p1029) target = $region44
        $region43: #{tpu_custom_call.1} parent=39 // pred_region
          %1033 = vsyncadd %s1025, 0
          %s1034 = smul.addr %s19, 8
          %s1035 = smul.addr %s1034, 8
          %s1036 = scalar_lea.hbm %s5, %s1035
          %s1037 = sshll.u32 %s1028, 4
          %s1038 = int_to_ptr.vmem [resolvable:$true] %s1037
          %s1039 = sshll.u32 %s1036, 4
          %s1040 = int_to_ptr.hbm [resolvable:$true] %s1039
          %1045 = dma.vmem_to_hbm [thread:$0]  %s1038, 1024, %s1040, %s1025, 128, 128, 8
        $region44: #{tpu_custom_call.1} parent=39 // pred_fallthru
          _
      $region40: #{tpu_custom_call.1} parent=5 // pred_fallthru
        _
      %p1046 = scmp.le.s32.totalorder 2, %s14
      // Predicated region
      $region45: #{tpu_custom_call.1} parent=5 // pred_check
        %p1047 = pneg %p1046
      $region46: #{tpu_custom_call.1} parent=5 // pred_check_branch
        %1049 = sbr.rel (%p1047) target = $region48
      $region47: #{tpu_custom_call.1} parent=5 // pred_region
        %s1050 = ssub.s32 %s14, 2
        // Predicated region
        $region49: #{tpu_custom_call.1} parent=47 // pred_check
          %p1051 = pneg %p153
        $region50: #{tpu_custom_call.1} parent=47 // pred_check_branch
          %1053 = sbr.rel (%p1051) target = $region52
        $region51: #{tpu_custom_call.1} parent=47 // pred_region
          %s1054 = sand.u32 %s138, 1
          %s1055 = scalar_lea.sflag [#allocation3], %s1054
          %s1056 = sand.u32 %s138, 1
          %s1057 = smul.addr %s1056, 64
          %s1058 = scalar_lea.vmem [#allocation2], %s1057
          %1060 = dma.done %s1055, 1024
        $region52: #{tpu_custom_call.1} parent=47 // pred_fallthru
          _
      $region48: #{tpu_custom_call.1} parent=5 // pred_fallthru
        _
    $region6: #{tpu_custom_call.1} parent=1 // loop_footer
      %s18 = sadd.s32 1, %s14
    $region7: #{tpu_custom_call.1} parent=1 // loop_footer_branch
      %13 = sbr.rel target = $region3
    $region8: #{tpu_custom_call.1} parent=1 // loop_exit
      _
    %1061 = vsyncpa [#allocation3], 1
    %s1062 = scalar_lea.sflag [#allocation3], 1
    %1063 = vsyncpa %s1062, 1

</llo_original>
